<compile_context>
chip_gen: v6e
topology: v6e:2x2x1
jax: 0.10.0
libtpu: 0.0.40
codegen_flags: <defaults>
</compile_context>

<pallas_src>
import functools

import jax
import jax.numpy as jnp
from jax.experimental import pallas as pl
from jax.experimental.pallas import tpu as pltpu


# ----------------------------------------------------------------------------
# Kernel
# ----------------------------------------------------------------------------
def _gnn_fused_kernel(a_ref, x_ref, *rest, ax_first):
    """Runs every GNNSimple layer for one block of B graphs.

    a_ref : (B, n, n)      adjacency block (VMEM-resident across all layers)
    x_ref : (B, n, D0)     input node features
    rest  : (w_0, ..., w_{L-1}, o_ref)
              w_l : ( 2*D_in_l, D_out_l )  if ax_first[l]   ([W1ᵀ ; W2ᵀ/n])
                    ( D_in_l, 2*D_out_l )  otherwise        ([W1ᵀ | W2ᵀ/n])
              o_ref : (B, n, D_last)
    """
    w_refs = rest[:-1]
    o_ref = rest[-1]
    B, n, _ = a_ref.shape
    L = len(w_refs)

    a = a_ref[...]                      # stays in compute dtype, resident for all layers
    cdt = a.dtype
    # n is padded to the sublane tile in the wrapper -> this reshape is a view.
    x = x_ref[...].reshape(B * n, x_ref.shape[-1])

    out = x.astype(jnp.float32)         # only used if L == 0
    for l, (w_ref, axf) in enumerate(zip(w_refs, ax_first)):
        w = w_ref[...]
        if axf:
            # out = [X | A@X] @ [W1ᵀ ; W2ᵀ/n]  -- single MXU matmul, fp32 accumulate.
            din = w.shape[0] // 2
            ax = jnp.einsum("bnm,bmd->bnd", a, x.reshape(B, n, din),
                            preferred_element_type=jnp.float32)        # (B, n, din)
            lhs = jnp.concatenate([x, ax.reshape(B * n, din).astype(cdt)], axis=1)
            out = jnp.dot(lhs, w, preferred_element_type=jnp.float32)  # (B*n, dout)
        else:
            # xw = X @ [W1ᵀ | W2ᵀ/n]; out = A @ x2 + x1
            dout = w.shape[1] // 2
            xw = jnp.dot(x, w, preferred_element_type=jnp.float32)     # (B*n, 2*dout)
            x1 = xw[:, :dout]
            x2 = xw[:, dout:].reshape(B, n, dout).astype(cdt)
            agg = jnp.einsum("bnm,bmo->bno", a, x2,
                             preferred_element_type=jnp.float32)       # (B, n, dout)
            out = agg.reshape(B * n, dout) + x1

        if l < L - 1:                    # ReLU between layers (not after the last one)
            x = jnp.maximum(out, 0.0).astype(cdt)

    # TODO(synk): output lanes are narrow (D_last << 128); a lane-dense (B, n*D_last)
    # store layout would avoid masked vst, but with full-stack fusion the single final
    # store is no longer on the critical path.
    o_ref[...] = out.reshape(B, n, out.shape[-1]).astype(o_ref.dtype)


# ----------------------------------------------------------------------------
# VMEM / block-size helpers (padding- and generation-aware)
# ----------------------------------------------------------------------------
def _round_up(x, m):
    return (x + m - 1) // m * m


def _tile_bytes(rows, cols, itemsize):
    """Bytes of a (rows, cols) slab after (sublane, 128-lane) padding in VMEM."""
    sub = 8 if itemsize >= 4 else 16
    return _round_up(rows, sub) * _round_up(cols, 128) * itemsize


def _vmem_capacity_bytes():
    try:
        info = pltpu.get_tpu_info()
        cap = getattr(info, "vmem_capacity_bytes", None)
        if cap:
            return int(cap)
    except Exception:
        pass
    return 64 * 1024 * 1024  # conservative fallback (v7x per-TensorCore VMEM)


def _plan_blocks(N, n_pad, dims, w_slabs, itemsize, batch_block):
    """Pick the per-step graph batch B and the scoped VMEM limit."""
    cap = _vmem_capacity_bytes()
    # Leave ~25% of physical VMEM for Mosaic internal scratch; never ask for more
    # than 96 MiB even on 128-MiB parts (v5e/v6e), ~48 MiB on 64-MiB v7x.
    vmem_limit = int(max(32 * 1024 * 1024, min(int(0.75 * cap), 96 * 1024 * 1024)))

    maxd = max(dims)
    a_t = _tile_bytes(n_pad, n_pad, itemsize)       # adjacency tile, per graph
    x_t = _tile_bytes(n_pad, dims[0], itemsize)     # input-feature tile, per graph
    o_t = _tile_bytes(n_pad, dims[-1], itemsize)    # output tile, per graph
    # fp32 in-kernel temporaries (generous peak estimate): a handful of (n, maxD)
    # slabs plus one (n, n) aggregation intermediate, all 128-lane padded.
    tmp = _round_up(n_pad, 8) * (6 * _round_up(maxd, 128) + _round_up(n_pad, 128)) * 4
    per_graph = 2 * (a_t + x_t + o_t) + tmp         # 2x = double-buffered tiles

    w_bytes = sum(2 * _tile_bytes(w.shape[0], w.shape[1], itemsize) for w in w_slabs)
    headroom = 4 * 1024 * 1024
    budget = max(vmem_limit - w_bytes - headroom, 1 * 1024 * 1024)

    b_vmem = max(1, budget // per_graph)
    if batch_block is not None:
        b = int(batch_block)
    else:
        # >= 2 grid steps: lets v7x's two TensorCores both work and keeps the
        # BlockSpec double-buffer pipeline fed (prefetch i+1 while computing i).
        b = int(max(1, min(b_vmem, pl.cdiv(N, 2), 1024)))
    return b, vmem_limit


# ----------------------------------------------------------------------------
# Forward pass (fused layer stack)
# ----------------------------------------------------------------------------
def gnn_forward(adj, feature, layer_weights, *, compute_dtype=jnp.float32,
                batch_block=None):
    """GNN.forward with model='simple'.

    Args:
      adj:            (N, n, n) adjacency matrices.
      feature:        (N, n, D0) node features ((N*n, D0) also accepted).
      layer_weights:  list of (W1, W2), each (D_out, D_in) in PyTorch nn.Linear layout.
      compute_dtype:  dtype of A/X fed to the MXU (accumulation is always fp32).
                      bfloat16 halves HBM traffic and is recommended on v7x.
    Returns:
      (N, n, D_last) output features in `compute_dtype`.
    """
    A = jnp.asarray(adj)
    X = jnp.asarray(feature)
    assert A.ndim == 3 and A.shape[1] == A.shape[2], "A must be of shape N x n x n"
    N, n, _ = A.shape
    if X.ndim == 2:
        X = X.reshape(N, n, -1)
    assert X.ndim == 3 and X.shape[0] == N and X.shape[1] == n, "X must be N x n x D1"

    if not layer_weights:
        return X.astype(compute_dtype)

    # ---- weight prep: transpose from PyTorch (D_out, D_in), fold 1/n into W2,
    # ---- and fuse the two weights into one slab per layer.
    dims = [X.shape[-1]]
    modes = []
    w_slabs = []
    for (W1, W2) in layer_weights:
        dout, din = W1.shape
        assert din == dims[-1], "layer_weights channel mismatch"
        w1t = jnp.asarray(W1, jnp.float32).T                    # (din, dout)
        w2t = jnp.asarray(W2, jnp.float32).T * (1.0 / n)        # (din, dout), pre-scaled
        axf = din <= dout                                       # reassociation choice
        slab = (jnp.concatenate([w1t, w2t], axis=0) if axf      # (2*din, dout)
                else jnp.concatenate([w1t, w2t], axis=1))       # (din, 2*dout)
        w_slabs.append(slab.astype(compute_dtype))
        dims.append(dout)
        modes.append(axf)

    itemsize = jnp.dtype(compute_dtype).itemsize
    sublane = 8 if itemsize >= 4 else 16
    n_pad = _round_up(n, sublane)

    B, vmem_limit = _plan_blocks(N, n_pad, dims, w_slabs, itemsize, batch_block)
    G = pl.cdiv(N, B)
    Np = G * B

    # ---- pad node axis (sublane alignment -> in-kernel reshapes are views) and
    # ---- graph axis (full blocks).  Zero-padded rows/graphs give zero outputs.
    A_c = jnp.asarray(A, compute_dtype)
    X_c = jnp.asarray(X, compute_dtype)
    if n_pad != n:
        A_c = jnp.pad(A_c, ((0, 0), (0, n_pad - n), (0, n_pad - n)))
        X_c = jnp.pad(X_c, ((0, 0), (0, n_pad - n), (0, 0)))
    if Np != N:
        A_c = jnp.pad(A_c, ((0, Np - N), (0, 0), (0, 0)))
        X_c = jnp.pad(X_c, ((0, Np - N), (0, 0), (0, 0)))

    # ---- advisory cost estimate (per-graph flops summed over layers).
    flops_per_graph = 0
    for (din, dout), axf in zip(zip(dims[:-1], dims[1:]), modes):
        if axf:
            flops_per_graph += 2 * n * n * din + 4 * n * din * dout
        else:
            flops_per_graph += 4 * n * din * dout + 2 * n * n * dout
    weight_bytes = sum(int(w.size) for w in w_slabs) * itemsize
    cost = pl.CostEstimate(
        flops=int(Np * flops_per_graph),
        transcendentals=0,
        bytes_accessed=int(Np * (n_pad * n_pad + n_pad * dims[0] + n_pad * dims[-1])
                           * itemsize + weight_bytes),
    )

    kernel = functools.partial(_gnn_fused_kernel, ax_first=tuple(modes))

    in_specs = [
        pl.BlockSpec((B, n_pad, n_pad), lambda b: (b, 0, 0)),      # A tile
        pl.BlockSpec((B, n_pad, dims[0]), lambda b: (b, 0, 0)),    # X tile
    ] + [
        pl.BlockSpec(w.shape, lambda b: (0, 0)) for w in w_slabs   # shared weight slabs
    ]

    out = pl.pallas_call(
        kernel,
        out_shape=jax.ShapeDtypeStruct((Np, n_pad, dims[-1]), compute_dtype),
        grid_spec=pltpu.PrefetchScalarGridSpec(
            num_scalar_prefetch=0,
            grid=(G,),
            in_specs=in_specs,
            out_specs=pl.BlockSpec((B, n_pad, dims[-1]), lambda b: (b, 0, 0)),
        ),
        compiler_params=pltpu.CompilerParams(
            dimension_semantics=("parallel",),   # megacore-shard the graph axis
            vmem_limit_bytes=vmem_limit,
        ),
        cost_estimate=cost,
    )(A_c, X_c, *w_slabs)

    if Np != N or n_pad != n:
        out = out[:N, :n, :]
    return out


def gnn_simple_layer(A, X, W1, W2, *, compute_dtype=jnp.float32):
    """Single GNNSimple_layer.forward (no activation), API-compatible: returns (A, out)."""
    out = gnn_forward(A, X, [(W1, W2)], compute_dtype=compute_dtype)
    return A, out


# ----------------------------------------------------------------------------
# Pure-JAX reference and demo
# ----------------------------------------------------------------------------
def _reference_gnn(A, X, layer_weights):
    A = jnp.asarray(A, jnp.float32)
    X = jnp.asarray(X, jnp.float32)
    n = A.shape[-1]
    L = len(layer_weights)
    for i, (W1, W2) in enumerate(layer_weights):
        x1 = jnp.einsum("bnd,od->bno", X, W1)
        x2 = jnp.einsum("bnd,od->bno", X, W2)
        X = jnp.einsum("bnm,bmo->bno", A, x2) / n + x1
        if i < L - 1:
            X = jnp.maximum(X, 0.0)
    return X


if __name__ == "__main__":
    key = jax.random.PRNGKey(0)
    N, n = 2, 16
    channel_list = [4, 8, 8]   # two GNNSimple layers with a ReLU in between

    key, kA, kX = jax.random.split(key, 3)
    A = jax.random.normal(kA, (N, n, n), dtype=jnp.float32)
    X = jax.random.normal(kX, (N, n, channel_list[0]), dtype=jnp.float32)

    layer_weights = []
    for i in range(len(channel_list) - 1):
        key, k1, k2 = jax.random.split(key, 3)
        d_in, d_out = channel_list[i], channel_list[i + 1]
        W1 = jax.random.uniform(k1, (d_out, d_in), jnp.float32, minval=-0.5, maxval=0.5)
        W2 = jax.random.uniform(k2, (d_out, d_in), jnp.float32, minval=-0.5, maxval=0.5)
        layer_weights.append((W1, W2))

    ref = _reference_gnn(A, X, layer_weights)

    # fp32 path: tight check against the pure-JAX reference.
    out_f32 = jax.block_until_ready(
        gnn_forward(A, X, layer_weights, compute_dtype=jnp.float32))
    assert out_f32.shape == (N, n, channel_list[-1])
    assert jnp.allclose(out_f32, ref, atol=1e-5, rtol=1e-5), "fp32 mismatch vs reference"

    # bf16-input path (halves A/X HBM traffic, fp32 MXU accumulation): relaxed check.
    out_bf16 = jax.block_until_ready(
        gnn_forward(A, X, layer_weights, compute_dtype=jnp.bfloat16))
    assert jnp.allclose(out_bf16.astype(jnp.float32), ref, atol=1.5e-1, rtol=1e-1), \
        "bf16 mismatch vs reference"

    # Single-layer API-parity wrapper.
    _, out_single = gnn_simple_layer(A, X, *layer_weights[0])
    jax.block_until_ready(out_single)

    print("KERNEL_OK")
</pallas_src>

<mosaic_0001>
module attributes {stable_mosaic.version = 11 : i64} {
  func.func @_gnn_fused_kernel(%arg0: i32, %arg1: memref<1x16x16xf32, #tpu.memory_space<vmem>>, %arg2: memref<1x16x4xf32, #tpu.memory_space<vmem>>, %arg3: memref<8x8xf32, #tpu.memory_space<vmem>>, %arg4: memref<16x8xf32, #tpu.memory_space<vmem>>, %arg5: memref<1x16x8xf32, #tpu.memory_space<vmem>>) attributes {dimension_semantics = [#tpu.dimension_semantics<parallel>], iteration_bounds = array<i64: 2>, scalar_prefetch = 0 : i64, scratch_operands = 0 : i64, tpu.core_type = #tpu.core_type<tc>, window_params = [{transform_indices = @transform_0, window_bounds = array<i64: 1, 16, 16>}, {transform_indices = @transform_1, window_bounds = array<i64: 1, 16, 4>}, {pipeline_mode = #tpu.pipeline_mode<synchronous>, transform_indices = @transform_2, window_bounds = array<i64: 8, 8>}, {pipeline_mode = #tpu.pipeline_mode<synchronous>, transform_indices = @transform_3, window_bounds = array<i64: 16, 8>}, {transform_indices = @transform_4, window_bounds = array<i64: 1, 16, 8>}]} {
    %c0 = arith.constant 0 : index
    %c0_0 = arith.constant 0 : index
    %c0_1 = arith.constant 0 : index
    %0 = vector.load %arg1[%c0, %c0_0, %c0_1] : memref<1x16x16xf32, #tpu.memory_space<vmem>>, vector<1x16x16xf32>
    %c0_2 = arith.constant 0 : index
    %c0_3 = arith.constant 0 : index
    %c0_4 = arith.constant 0 : index
    %1 = vector.load %arg2[%c0_2, %c0_3, %c0_4] : memref<1x16x4xf32, #tpu.memory_space<vmem>>, vector<1x16x4xf32>
    %2 = vector.shape_cast %1 : vector<1x16x4xf32> to vector<16x4xf32>
    %c0_5 = arith.constant 0 : index
    %c0_6 = arith.constant 0 : index
    %3 = vector.load %arg3[%c0_5, %c0_6] : memref<8x8xf32, #tpu.memory_space<vmem>>, vector<8x8xf32>
    %4 = vector.shape_cast %2 : vector<16x4xf32> to vector<1x16x4xf32>
    "tpu.trace_start"() <{level = 10 : i32, message = "bnm,bmd->bnd"}> : () -> ()
    %cst = arith.constant dense<0.000000e+00> : vector<1x16x4xf32>
    %5 = tpu.matmul %0, %4, %cst {dimension_numbers = #tpu.dot_dimension_numbers<[2], [1], [1], [2], [0, 0, 0, 1, 1, 2], [0], [0]>} : vector<1x16x16xf32>, vector<1x16x4xf32>, vector<1x16x4xf32> -> vector<1x16x4xf32>
    "tpu.trace_stop"() : () -> ()
    %6 = vector.shape_cast %5 : vector<1x16x4xf32> to vector<16x4xf32>
    %7 = tpu.concatenate %2, %6 in 1 : vector<16x4xf32>, vector<16x4xf32> -> vector<16x8xf32>
    %cst_7 = arith.constant dense<0.000000e+00> : vector<16x8xf32>
    %8 = tpu.matmul %7, %3, %cst_7 {dimension_numbers = #tpu.dot_dimension_numbers<[1], [0], [0], [1], [0, 0, 1, 1], [], []>} : vector<16x8xf32>, vector<8x8xf32>, vector<16x8xf32> -> vector<16x8xf32>
    %cst_8 = arith.constant 0.000000e+00 : f32
    %9 = vector.broadcast %cst_8 : f32 to vector<16x8xf32>
    %10 = arith.maximumf %8, %9 : vector<16x8xf32>
    %c0_9 = arith.constant 0 : index
    %c0_10 = arith.constant 0 : index
    %11 = vector.load %arg4[%c0_9, %c0_10] : memref<16x8xf32, #tpu.memory_space<vmem>>, vector<16x8xf32>
    %12 = vector.shape_cast %10 : vector<16x8xf32> to vector<1x16x8xf32>
    "tpu.trace_start"() <{level = 10 : i32, message = "bnm,bmd->bnd"}> : () -> ()
    %cst_11 = arith.constant dense<0.000000e+00> : vector<1x16x8xf32>
    %13 = tpu.matmul %0, %12, %cst_11 {dimension_numbers = #tpu.dot_dimension_numbers<[2], [1], [1], [2], [0, 0, 0, 1, 1, 2], [0], [0]>} : vector<1x16x16xf32>, vector<1x16x8xf32>, vector<1x16x8xf32> -> vector<1x16x8xf32>
    "tpu.trace_stop"() : () -> ()
    %14 = vector.shape_cast %13 : vector<1x16x8xf32> to vector<16x8xf32>
    %15 = tpu.concatenate %10, %14 in 1 : vector<16x8xf32>, vector<16x8xf32> -> vector<16x16xf32>
    %cst_12 = arith.constant dense<0.000000e+00> : vector<16x8xf32>
    %16 = tpu.matmul %15, %11, %cst_12 {dimension_numbers = #tpu.dot_dimension_numbers<[1], [0], [0], [1], [0, 0, 1, 1], [], []>} : vector<16x16xf32>, vector<16x8xf32>, vector<16x8xf32> -> vector<16x8xf32>
    %17 = vector.shape_cast %16 : vector<16x8xf32> to vector<1x16x8xf32>
    %c0_13 = arith.constant 0 : index
    %c0_14 = arith.constant 0 : index
    %c0_15 = arith.constant 0 : index
    %18 = vector.load %arg5[%c0_13, %c0_14, %c0_15] : memref<1x16x8xf32, #tpu.memory_space<vmem>>, vector<1x16x8xf32>
    tpu.vector_store %arg5[%c0_13, %c0_14, %c0_15], %17 {strides = array<i32>} : memref<1x16x8xf32, #tpu.memory_space<vmem>>, vector<1x16x8xf32>,
    return
  }
  func.func @transform_0(%arg0: i32) -> (i32, i32, i32) {
    %c0_i32 = arith.constant 0 : i32
    %c0_i32_0 = arith.constant 0 : i32
    %c0_i32_1 = arith.constant 0 : i32
    return %arg0, %c0_i32, %c0_i32_0 : i32, i32, i32
  }
  func.func @transform_1(%arg0: i32) -> (i32, i32, i32) {
    %c0_i32 = arith.constant 0 : i32
    %c0_i32_0 = arith.constant 0 : i32
    %c0_i32_1 = arith.constant 0 : i32
    return %arg0, %c0_i32, %c0_i32_0 : i32, i32, i32
  }
  func.func @transform_2(%arg0: i32) -> (i32, i32) {
    %c0_i32 = arith.constant 0 : i32
    %c0_i32_0 = arith.constant 0 : i32
    %c0_i32_1 = arith.constant 0 : i32
    return %c0_i32, %c0_i32_0 : i32, i32
  }
  func.func @transform_3(%arg0: i32) -> (i32, i32) {
    %c0_i32 = arith.constant 0 : i32
    %c0_i32_0 = arith.constant 0 : i32
    %c0_i32_1 = arith.constant 0 : i32
    return %c0_i32, %c0_i32_0 : i32, i32
  }
  func.func @transform_4(%arg0: i32) -> (i32, i32, i32) {
    %c0_i32 = arith.constant 0 : i32
    %c0_i32_0 = arith.constant 0 : i32
    %c0_i32_1 = arith.constant 0 : i32
    return %arg0, %c0_i32, %c0_i32_0 : i32, i32, i32
  }
}

</mosaic_0001>

<llo_original>
// kernel: tpu_custom_call.1
$region0: #{tpu_custom_call.1}
  #allocation0 [shape = 'u32[]', space=smem, size = 0x4, offset = 0x4, fixed_abs, tag = 'smem constant byte address 0x4 - core index']
  #allocation1 [shape = 'u32[144,128]{1,0:T(1,128)}', space=vmem, size = 0x12000, scoped, tag = 'internal scratch']
  %s0 = inlined_call_operand.vmem [shape: f32[2,16,16], index: 0, kind: input, shape index: {}]
  %s1 = inlined_call_operand.vmem [shape: f32[2,16,4], index: 1, kind: input, shape index: {}]
  %s2 = inlined_call_operand.vmem [shape: f32[8,8], index: 2, kind: input, shape index: {}]
  %s3 = inlined_call_operand.vmem [shape: f32[16,8], index: 3, kind: input, shape index: {}]
  %s4 = inlined_call_operand.vmem [shape: f32[2,16,8], index: 4, kind: output, shape index: {}]
  %s5 = sld [smem:[#allocation0]]
  $region49: #{tpu_custom_call.1} parent=0
    _
  %s7 = ssub.s32 1, %s5
  %s8 = scalar_select 0, %s7, %s5
  loop: start=0, step=1, limit=4
  $region2: #{tpu_custom_call.1} parent=0 // loop_pre_header
    _
  $region3: #{tpu_custom_call.1} parent=0 // loop_header
    %s10 = sphi 0, %s14
    %p11 = scmp.ge.s32.totalorder %s10, 4
    %s20 = sphi 0, %s22
    %s23 = sphi 0, %s20
    %s24 = sphi 0, %s23
    %s40 = sphi 0, %s24
    %s46 = sphi 0, %s48
    %s49 = sphi 0, %s46
    %s50 = sphi 0, %s49
    %s66 = sphi 0, %s50
    %s70 = sphi 0, %s70
    %s72 = sphi 0, %s70
    %s73 = sphi 0, %s72
    %s87 = sphi 0, %s73
    %s91 = sphi 0, %s91
    %s93 = sphi 0, %s91
    %s94 = sphi 0, %s93
    %s108 = sphi 0, %s94
    %s114 = sphi 0, %s116
    %s117 = sphi 0, %s114
    %s118 = sphi 0, %s117
    %s134 = sphi 0, %s118
  $region4: #{tpu_custom_call.1} parent=0 // loop_header_branch
    %13 = sbr.rel (%p11) target = $region8
  $region5: #{tpu_custom_call.1} parent=0 // loop_body
    %s15 = ssub.s32 %s10, 1
    %s16 = ssub.s32 %s10, 2
    %s17 = sadd.s32 %s10, 1
    %s18 = ssub.s32 %s10, %s17
    %p19 = scmp.eq.s32.totalorder %s18, 0
    %s21 = sadd.s32 %s20, 1
    %s22 = scalar_select %p19, %s20, %s21
    %p25 = pneg %p19
    %p26 = scmp.eq.s32.totalorder %s10, 1
    %p27 = por %p25, %p26
    %p28 = scmp.ne.s32.totalorder %s20, %s23
    %p29 = scmp.eq.s32.totalorder %s10, 0
    %p30 = por %p28, %p29
    %p31 = scmp.ne.s32.totalorder %s20, %s23
    %p32 = scmp.eq.s32.totalorder %s15, 1
    %p33 = por %p31, %p32
    %p34 = scmp.ne.s32.totalorder %s23, %s24
    %p35 = scmp.eq.s32.totalorder %s15, 0
    %p36 = por %p34, %p35
    %p37 = scmp.ne.s32.totalorder %s23, %s24
    %p38 = scmp.eq.s32.totalorder %s16, 1
    %p39 = por %p37, %p38
    %p41 = scmp.ne.s32.totalorder %s24, %s40
    %p42 = scmp.eq.s32.totalorder %s16, 0
    %p43 = por %p41, %p42
    %s44 = ssub.s32 %s10, %s17
    %p45 = scmp.eq.s32.totalorder %s44, 0
    %s47 = sadd.s32 %s46, 1
    %s48 = scalar_select %p45, %s46, %s47
    %p51 = pneg %p45
    %p52 = scmp.eq.s32.totalorder %s10, 1
    %p53 = por %p51, %p52
    %p54 = scmp.ne.s32.totalorder %s46, %s49
    %p55 = scmp.eq.s32.totalorder %s10, 0
    %p56 = por %p54, %p55
    %p57 = scmp.ne.s32.totalorder %s46, %s49
    %p58 = scmp.eq.s32.totalorder %s15, 1
    %p59 = por %p57, %p58
    %p60 = scmp.ne.s32.totalorder %s49, %s50
    %p61 = scmp.eq.s32.totalorder %s15, 0
    %p62 = por %p60, %p61
    %p63 = scmp.ne.s32.totalorder %s49, %s50
    %p64 = scmp.eq.s32.totalorder %s16, 1
    %p65 = por %p63, %p64
    %p67 = scmp.ne.s32.totalorder %s50, %s66
    %p68 = scmp.eq.s32.totalorder %s16, 0
    %p69 = por %p67, %p68
    %s71 = sadd.s32 %s70, 1
    %p74 = scmp.eq.s32.totalorder %s10, 1
    %p75 = scmp.ne.s32.totalorder %s70, %s72
    %p76 = scmp.eq.s32.totalorder %s10, 0
    %p77 = por %p75, %p76
    %p78 = scmp.ne.s32.totalorder %s70, %s72
    %p79 = scmp.eq.s32.totalorder %s15, 1
    %p80 = por %p78, %p79
    %p81 = scmp.ne.s32.totalorder %s72, %s73
    %p82 = scmp.eq.s32.totalorder %s15, 0
    %p83 = por %p81, %p82
    %p84 = scmp.ne.s32.totalorder %s72, %s73
    %p85 = scmp.eq.s32.totalorder %s16, 1
    %p86 = por %p84, %p85
    %p88 = scmp.ne.s32.totalorder %s73, %s87
    %p89 = scmp.eq.s32.totalorder %s16, 0
    %p90 = por %p88, %p89
    %s92 = sadd.s32 %s91, 1
    %p95 = scmp.eq.s32.totalorder %s10, 1
    %p96 = scmp.ne.s32.totalorder %s91, %s93
    %p97 = scmp.eq.s32.totalorder %s10, 0
    %p98 = por %p96, %p97
    %p99 = scmp.ne.s32.totalorder %s91, %s93
    %p100 = scmp.eq.s32.totalorder %s15, 1
    %p101 = por %p99, %p100
    %p102 = scmp.ne.s32.totalorder %s93, %s94
    %p103 = scmp.eq.s32.totalorder %s15, 0
    %p104 = por %p102, %p103
    %p105 = scmp.ne.s32.totalorder %s93, %s94
    %p106 = scmp.eq.s32.totalorder %s16, 1
    %p107 = por %p105, %p106
    %p109 = scmp.ne.s32.totalorder %s94, %s108
    %p110 = scmp.eq.s32.totalorder %s16, 0
    %p111 = por %p109, %p110
    %s112 = ssub.s32 %s10, %s17
    %p113 = scmp.eq.s32.totalorder %s112, 0
    %s115 = sadd.s32 %s114, 1
    %s116 = scalar_select %p113, %s114, %s115
    %p119 = pneg %p113
    %p120 = scmp.eq.s32.totalorder %s10, 1
    %p121 = por %p119, %p120
    %p122 = scmp.ne.s32.totalorder %s114, %s117
    %p123 = scmp.eq.s32.totalorder %s10, 0
    %p124 = por %p122, %p123
    %p125 = scmp.ne.s32.totalorder %s114, %s117
    %p126 = scmp.eq.s32.totalorder %s15, 1
    %p127 = por %p125, %p126
    %p128 = scmp.ne.s32.totalorder %s117, %s118
    %p129 = scmp.eq.s32.totalorder %s15, 0
    %p130 = por %p128, %p129
    %p131 = scmp.ne.s32.totalorder %s117, %s118
    %p132 = scmp.eq.s32.totalorder %s16, 1
    %p133 = por %p131, %p132
    %p135 = scmp.ne.s32.totalorder %s118, %s134
    %p136 = scmp.eq.s32.totalorder %s16, 0
    %p137 = por %p135, %p136
    %p138 = scmp.le.s32.totalorder 1, %s10
    %p139 = scmp.lt.s32.totalorder %s10, 3
    %p140 = pnand %p138, %p139
    %p141 = pneg %p140
    // Predicated region
    $region9: #{tpu_custom_call.1} parent=5 // pred_check
      _
    $region10: #{tpu_custom_call.1} parent=5 // pred_check_branch
      %143 = sbr.rel (%p140) target = $region12
    $region11: #{tpu_custom_call.1} parent=5 // pred_region
      %s144 = ssub.s32 %s10, 1
      // Predicated region
      $region13: #{tpu_custom_call.1} parent=11 // pred_check
        %p145 = pneg %p83
      $region14: #{tpu_custom_call.1} parent=11 // pred_check_branch
        %147 = sbr.rel (%p145) target = $region16
      $region15: #{tpu_custom_call.1} parent=11 // pred_region
        _
      $region16: #{tpu_custom_call.1} parent=11 // pred_fallthru
        _
      // Predicated region
      $region17: #{tpu_custom_call.1} parent=11 // pred_check
        %p148 = pneg %p104
      $region18: #{tpu_custom_call.1} parent=11 // pred_check_branch
        %150 = sbr.rel (%p148) target = $region20
      $region19: #{tpu_custom_call.1} parent=11 // pred_region
        _
      $region20: #{tpu_custom_call.1} parent=11 // pred_fallthru
        _
    $region12: #{tpu_custom_call.1} parent=5 // pred_fallthru
      _
    %p151 = scmp.lt.s32.totalorder %s10, 2
    // Predicated region
    $region21: #{tpu_custom_call.1} parent=5 // pred_check
      %p152 = pneg %p151
    $region22: #{tpu_custom_call.1} parent=5 // pred_check_branch
      %154 = sbr.rel (%p152) target = $region24
    $region23: #{tpu_custom_call.1} parent=5 // pred_region
      // Predicated region
      $region25: #{tpu_custom_call.1} parent=23 // pred_check
        %p155 = pneg %p30
      $region26: #{tpu_custom_call.1} parent=23 // pred_check_branch
        %157 = sbr.rel (%p155) target = $region28
      $region27: #{tpu_custom_call.1} parent=23 // pred_region
        %p158 = scmp.lt.s32.totalorder %s10, 1
        %s159 = scalar_select %p158, %s10, 1
        %s160 = smul.addr %s159, 2
        %s161 = smul.addr %s160, 8
        %s162 = scalar_lea.vmem %s0, %s161
      $region28: #{tpu_custom_call.1} parent=23 // pred_fallthru
        _
      // Predicated region
      $region29: #{tpu_custom_call.1} parent=23 // pred_check
        %p163 = pneg %p56
      $region30: #{tpu_custom_call.1} parent=23 // pred_check_branch
        %165 = sbr.rel (%p163) target = $region32
      $region31: #{tpu_custom_call.1} parent=23 // pred_region
        %p166 = scmp.lt.s32.totalorder %s10, 1
        %s167 = scalar_select %p166, %s10, 1
        %s168 = smul.addr %s167, 2
        %s169 = smul.addr %s168, 8
        %s170 = scalar_lea.vmem %s1, %s169
      $region32: #{tpu_custom_call.1} parent=23 // pred_fallthru
        _
    $region24: #{tpu_custom_call.1} parent=5 // pred_fallthru
      _
    %p171 = scmp.le.s32.totalorder 1, %s10
    %p172 = scmp.lt.s32.totalorder %s10, 3
    %p173 = pnand %p171, %p172
    %p174 = pneg %p173
    // Predicated region
    $region33: #{tpu_custom_call.1} parent=5 // pred_check
      _
    $region34: #{tpu_custom_call.1} parent=5 // pred_check_branch
      %176 = sbr.rel (%p173) target = $region36
    $region35: #{tpu_custom_call.1} parent=5 // pred_region
      %s177 = ssub.s32 %s10, 1
      %p178 = scmp.lt.s32.totalorder %s15, 1
      %s179 = scalar_select %p178, %s15, 1
      %s180 = smul.addr %s179, 2
      %s181 = smul.addr %s180, 8
      %s182 = scalar_lea.vmem %s0, %s181
      %p183 = pneg %p36
      %p184 = pneg %p33
      %p185 = scmp.lt.s32.totalorder %s15, 1
      %s186 = scalar_select %p185, %s15, 1
      %s187 = smul.addr %s186, 2
      %s188 = smul.addr %s187, 8
      %s189 = scalar_lea.vmem %s1, %s188
      %p190 = pneg %p62
      %p191 = pneg %p59
      %p192 = pneg %p83
      %p193 = pneg %p80
      %p194 = pneg %p104
      %p195 = pneg %p101
      %p196 = pneg %p130
      %p197 = pneg %p127
      %p198 = scmp.lt.s32.totalorder %s15, 1
      %s199 = scalar_select %p198, %s15, 1
      %s200 = smul.addr %s199, 2
      %s201 = smul.addr %s200, 8
      %s202 = scalar_lea.vmem %s4, %s201
      %p203 = scmp.lt.s32.totalorder %s15, 1
      %s204 = scalar_select %p203, %s15, 1
      %s205 = smul.addr %s204, 2
      %s206 = smul.addr %s205, 8
      %s207 = scalar_lea.vmem %s0, %s206
      %p208 = scmp.lt.s32.totalorder %s15, 1
      %s209 = scalar_select %p208, %s15, 1
      %s210 = smul.addr %s209, 2
      %s211 = smul.addr %s210, 8
      %s212 = scalar_lea.vmem %s1, %s211
      %p213 = scmp.lt.s32.totalorder %s15, 1
      %s214 = scalar_select %p213, %s15, 1
      %s215 = smul.addr %s214, 2
      %s216 = smul.addr %s215, 8
      %s217 = scalar_lea.vmem %s4, %s216
      %v218 = vld [vmem:[%s207] sm:$0xff]
      %v219 = vld [vmem:[%s207 + $0x8] sm:$0xff]
      %v220 = vld [vmem:[%s212] sm:$0xff]
      %v221 = vld [vmem:[%s212 + $0x8] sm:$0xff]
      %v222 = vld [vmem:[%s2] sm:$0xff]
      %vm223 = vcmask 130048
      %v225 = vsel %vm223, %v218, 0
      %v228 = vsel %vm223, %v219, 0
      %230 = vmatprep.subr.mxu0 0.0
      %231 = vmatpush1.msra.mxu0 0.0
      %232 = vmatprep.subr.mxu0 0.0
      %233 = vmatpush1.msra.mxu0 0.0
      %234 = vmatprep.subr.mxu0 0.0
      %235 = vmatpush1.msra.mxu0 0.0
      %236 = vmatprep.subr.mxu0 0.0
      %237 = vmatpush1.msra.mxu0 0.0
      %238 = vmatprep.subr.mxu0 0.0
      %239 = vmatpush1.msra.mxu0 0.0
      %240 = vmatprep.subr.mxu0 0.0
      %241 = vmatpush1.msra.mxu0 0.0
      %242 = vmatprep.subr.mxu0 0.0
      %243 = vmatpush1.msra.mxu0 0.0
      %244 = vmatprep.subr.mxu0 0.0
      %245 = vmatpush1.msra.mxu0 0.0
      %246 = vmatprep.subr.mxu0 0.0
      %247 = vmatpush1.msra.mxu0 0.0
      %248 = vmatprep.subr.mxu0 0.0
      %249 = vmatpush1.msra.mxu0 0.0
      %250 = vmatprep.subr.mxu0 0.0
      %251 = vmatpush1.msra.mxu0 0.0
      %252 = vmatprep.subr.mxu0 0.0
      %253 = vmatpush1.msra.mxu0 0.0
      %254 = vmatprep.subr.mxu0 0.0
      %255 = vmatpush1.msra.mxu0 0.0
      %256 = vmatprep.subr.mxu0 0.0
      %257 = vmatpush1.msra.mxu0 0.0
      %258 = vmatprep.subr.mxu0 0.0
      %259 = vmatpush1.msra.mxu0 %v221
      %260 = vmatprep.subr.mxu0 0.0
      %261 = vmatpush1.msra.mxu0 %v220
      %262 = vmatprep.subr.mxu0 0.0
      %263 = vmatpush2.msra.mxu0 0.0
      %264 = vmatprep.subr.mxu0 0.0
      %265 = vmatpush2.msra.mxu0 0.0
      %266 = vmatprep.subr.mxu0 0.0
      %267 = vmatpush2.msra.mxu0 0.0
      %268 = vmatprep.subr.mxu0 0.0
      %269 = vmatpush2.msra.mxu0 0.0
      %270 = vmatprep.subr.mxu0 0.0
      %271 = vmatpush2.msra.mxu0 0.0
      %272 = vmatprep.subr.mxu0 0.0
      %273 = vmatpush2.msra.mxu0 0.0
      %274 = vmatprep.subr.mxu0 0.0
      %275 = vmatpush2.msra.mxu0 0.0
      %276 = vmatprep.subr.mxu0 0.0
      %277 = vmatpush2.msra.mxu0 0.0
      %278 = vmatprep.subr.mxu0 0.0
      %279 = vmatpush2.msra.mxu0 0.0
      %280 = vmatprep.subr.mxu0 0.0
      %281 = vmatpush2.msra.mxu0 0.0
      %282 = vmatprep.subr.mxu0 0.0
      %283 = vmatpush2.msra.mxu0 0.0
      %284 = vmatprep.subr.mxu0 0.0
      %285 = vmatpush2.msra.mxu0 0.0
      %286 = vmatprep.subr.mxu0 0.0
      %287 = vmatpush2.msra.mxu0 0.0
      %288 = vmatprep.subr.mxu0 0.0
      %289 = vmatpush2.msra.mxu0 0.0
      %290 = vmatprep.subr.mxu0 0.0
      %291 = vmatpush2.msra.mxu0 0.0
      %292 = vmatprep.subr.mxu0 0.0
      %293 = vmatpush2.msra.mxu0 0.0
      %294 = vmatprep.mubr.f32.mxu0 0.0
      %295 = vmatmul.mubr.f32.gmra.mxu0 %v225
      %v296 = vpop.f32.mrf.mxu0
      %v297 = vadd.f32 0.0, %v296
      %v298 = vpop.f32.mrf.mxu0
      %299 = vmatprep.mubr.f32.mxu0 0.0
      %300 = vmatmul.mubr.f32.gmra.mxu0 %v228
      %v301 = vpop.f32.mrf.mxu0
      %v302 = vadd.f32 0.0, %v301
      %v303 = vpop.f32.mrf.mxu0
      %304 = vdwg.mxu0
      %307 = vrot.lane.b32.xlu0 %v297, 4
      %v308 = vpop.permute.xlu0 %307
      %309 = vrot.lane.b32.xlu0 %v302, 4
      %v310 = vpop.permute.xlu0 %309
      %vm313 = vcmask 31744
      %v314 = vsel %vm313, %v220, %v308
      %v315 = vsel %vm313, %v221, %v310
      %vm316 = vcmask 64512
      %v318 = vsel %vm316, %v314, 0
      %v321 = vsel %vm316, %v315, 0
      %323 = vmatprep.subr.mxu0 0.0
      %324 = vmatpush1.msra.mxu0 0.0
      %325 = vmatprep.subr.mxu0 0.0
      %326 = vmatpush1.msra.mxu0 0.0
      %327 = vmatprep.subr.mxu0 0.0
      %328 = vmatpush1.msra.mxu0 0.0
      %329 = vmatprep.subr.mxu0 0.0
      %330 = vmatpush1.msra.mxu0 0.0
      %331 = vmatprep.subr.mxu0 0.0
      %332 = vmatpush1.msra.mxu0 0.0
      %333 = vmatprep.subr.mxu0 0.0
      %334 = vmatpush1.msra.mxu0 0.0
      %335 = vmatprep.subr.mxu0 0.0
      %336 = vmatpush1.msra.mxu0 0.0
      %337 = vmatprep.subr.mxu0 0.0
      %338 = vmatpush1.msra.mxu0 0.0
      %339 = vmatprep.subr.mxu0 0.0
      %340 = vmatpush1.msra.mxu0 0.0
      %341 = vmatprep.subr.mxu0 0.0
      %342 = vmatpush1.msra.mxu0 0.0
      %343 = vmatprep.subr.mxu0 0.0
      %344 = vmatpush1.msra.mxu0 0.0
      %345 = vmatprep.subr.mxu0 0.0
      %346 = vmatpush1.msra.mxu0 0.0
      %347 = vmatprep.subr.mxu0 0.0
      %348 = vmatpush1.msra.mxu0 0.0
      %349 = vmatprep.subr.mxu0 0.0
      %350 = vmatpush1.msra.mxu0 0.0
      %351 = vmatprep.subr.mxu0 0.0
      %352 = vmatpush1.msra.mxu0 0.0
      %353 = vmatprep.subr.mxu0 0.0
      %354 = vmatpush1.msra.mxu0 %v222
      %355 = vmatprep.subr.mxu0 0.0
      %356 = vmatpush2.msra.mxu0 0.0
      %357 = vmatprep.subr.mxu0 0.0
      %358 = vmatpush2.msra.mxu0 0.0
      %359 = vmatprep.subr.mxu0 0.0
      %360 = vmatpush2.msra.mxu0 0.0
      %361 = vmatprep.subr.mxu0 0.0
      %362 = vmatpush2.msra.mxu0 0.0
      %363 = vmatprep.subr.mxu0 0.0
      %364 = vmatpush2.msra.mxu0 0.0
      %365 = vmatprep.subr.mxu0 0.0
      %366 = vmatpush2.msra.mxu0 0.0
      %367 = vmatprep.subr.mxu0 0.0
      %368 = vmatpush2.msra.mxu0 0.0
      %369 = vmatprep.subr.mxu0 0.0
      %370 = vmatpush2.msra.mxu0 0.0
      %371 = vmatprep.subr.mxu0 0.0
      %372 = vmatpush2.msra.mxu0 0.0
      %373 = vmatprep.subr.mxu0 0.0
      %374 = vmatpush2.msra.mxu0 0.0
      %375 = vmatprep.subr.mxu0 0.0
      %376 = vmatpush2.msra.mxu0 0.0
      %377 = vmatprep.subr.mxu0 0.0
      %378 = vmatpush2.msra.mxu0 0.0
      %379 = vmatprep.subr.mxu0 0.0
      %380 = vmatpush2.msra.mxu0 0.0
      %381 = vmatprep.subr.mxu0 0.0
      %382 = vmatpush2.msra.mxu0 0.0
      %383 = vmatprep.subr.mxu0 0.0
      %384 = vmatpush2.msra.mxu0 0.0
      %385 = vmatprep.subr.mxu0 0.0
      %386 = vmatpush2.msra.mxu0 0.0
      %387 = vmatprep.mubr.f32.mxu0 0.0
      %388 = vmatmul.mubr.f32.gmra.mxu0 %v318
      %v389 = vpop.f32.mrf.mxu0
      %v390 = vadd.f32 0.0, %v389
      %v391 = vpop.f32.mrf.mxu0
      %392 = vmatprep.mubr.f32.mxu0 0.0
      %393 = vmatmul.mubr.f32.gmra.mxu0 %v321
      %v394 = vpop.f32.mrf.mxu0
      %v395 = vadd.f32 0.0, %v394
      %v396 = vpop.f32.mrf.mxu0
      %397 = vdwg.mxu0
      %v398 = vmax.f32 %v390, 0.0
      %v399 = vmax.f32 %v395, 0.0
      %v400 = vld [vmem:[%s3] sm:$0xff]
      %v401 = vld [vmem:[%s3 + $0x8] sm:$0xff]
      %402 = vmatprep.subr.mxu0 0.0
      %403 = vmatpush1.msra.mxu0 0.0
      %404 = vmatprep.subr.mxu0 0.0
      %405 = vmatpush1.msra.mxu0 0.0
      %406 = vmatprep.subr.mxu0 0.0
      %407 = vmatpush1.msra.mxu0 0.0
      %408 = vmatprep.subr.mxu0 0.0
      %409 = vmatpush1.msra.mxu0 0.0
      %410 = vmatprep.subr.mxu0 0.0
      %411 = vmatpush1.msra.mxu0 0.0
      %412 = vmatprep.subr.mxu0 0.0
      %413 = vmatpush1.msra.mxu0 0.0
      %414 = vmatprep.subr.mxu0 0.0
      %415 = vmatpush1.msra.mxu0 0.0
      %416 = vmatprep.subr.mxu0 0.0
      %417 = vmatpush1.msra.mxu0 0.0
      %418 = vmatprep.subr.mxu0 0.0
      %419 = vmatpush1.msra.mxu0 0.0
      %420 = vmatprep.subr.mxu0 0.0
      %421 = vmatpush1.msra.mxu0 0.0
      %422 = vmatprep.subr.mxu0 0.0
      %423 = vmatpush1.msra.mxu0 0.0
      %424 = vmatprep.subr.mxu0 0.0
      %425 = vmatpush1.msra.mxu0 0.0
      %426 = vmatprep.subr.mxu0 0.0
      %427 = vmatpush1.msra.mxu0 0.0
      %428 = vmatprep.subr.mxu0 0.0
      %429 = vmatpush1.msra.mxu0 0.0
      %430 = vmatprep.subr.mxu0 0.0
      %431 = vmatpush1.msra.mxu0 %v399
      %432 = vmatprep.subr.mxu0 0.0
      %433 = vmatpush1.msra.mxu0 %v398
      %434 = vmatprep.subr.mxu0 0.0
      %435 = vmatpush2.msra.mxu0 0.0
      %436 = vmatprep.subr.mxu0 0.0
      %437 = vmatpush2.msra.mxu0 0.0
      %438 = vmatprep.subr.mxu0 0.0
      %439 = vmatpush2.msra.mxu0 0.0
      %440 = vmatprep.subr.mxu0 0.0
      %441 = vmatpush2.msra.mxu0 0.0
      %442 = vmatprep.subr.mxu0 0.0
      %443 = vmatpush2.msra.mxu0 0.0
      %444 = vmatprep.subr.mxu0 0.0
      %445 = vmatpush2.msra.mxu0 0.0
      %446 = vmatprep.subr.mxu0 0.0
      %447 = vmatpush2.msra.mxu0 0.0
      %448 = vmatprep.subr.mxu0 0.0
      %449 = vmatpush2.msra.mxu0 0.0
      %450 = vmatprep.subr.mxu0 0.0
      %451 = vmatpush2.msra.mxu0 0.0
      %452 = vmatprep.subr.mxu0 0.0
      %453 = vmatpush2.msra.mxu0 0.0
      %454 = vmatprep.subr.mxu0 0.0
      %455 = vmatpush2.msra.mxu0 0.0
      %456 = vmatprep.subr.mxu0 0.0
      %457 = vmatpush2.msra.mxu0 0.0
      %458 = vmatprep.subr.mxu0 0.0
      %459 = vmatpush2.msra.mxu0 0.0
      %460 = vmatprep.subr.mxu0 0.0
      %461 = vmatpush2.msra.mxu0 0.0
      %462 = vmatprep.subr.mxu0 0.0
      %463 = vmatpush2.msra.mxu0 0.0
      %464 = vmatprep.subr.mxu0 0.0
      %465 = vmatpush2.msra.mxu0 0.0
      %466 = vmatprep.mubr.f32.mxu0 0.0
      %467 = vmatmul.mubr.f32.gmra.mxu0 %v225
      %v468 = vpop.f32.mrf.mxu0
      %v469 = vadd.f32 0.0, %v468
      %v470 = vpop.f32.mrf.mxu0
      %471 = vmatprep.mubr.f32.mxu0 0.0
      %472 = vmatmul.mubr.f32.gmra.mxu0 %v228
      %v473 = vpop.f32.mrf.mxu0
      %v474 = vadd.f32 0.0, %v473
      %v475 = vpop.f32.mrf.mxu0
      %476 = vdwg.mxu0
      %479 = vrot.lane.b32.xlu0 %v469, 8
      %v480 = vpop.permute.xlu0 %479
      %481 = vrot.lane.b32.xlu0 %v474, 8
      %v482 = vpop.permute.xlu0 %481
      %v485 = vsel %vm316, %v398, %v480
      %v486 = vsel %vm316, %v399, %v482
      %v488 = vsel %vm223, %v485, 0
      %v491 = vsel %vm223, %v486, 0
      %493 = vmatprep.subr.mxu0 0.0
      %494 = vmatpush1.msra.mxu0 0.0
      %495 = vmatprep.subr.mxu0 0.0
      %496 = vmatpush1.msra.mxu0 0.0
      %497 = vmatprep.subr.mxu0 0.0
      %498 = vmatpush1.msra.mxu0 0.0
      %499 = vmatprep.subr.mxu0 0.0
      %500 = vmatpush1.msra.mxu0 0.0
      %501 = vmatprep.subr.mxu0 0.0
      %502 = vmatpush1.msra.mxu0 0.0
      %503 = vmatprep.subr.mxu0 0.0
      %504 = vmatpush1.msra.mxu0 0.0
      %505 = vmatprep.subr.mxu0 0.0
      %506 = vmatpush1.msra.mxu0 0.0
      %507 = vmatprep.subr.mxu0 0.0
      %508 = vmatpush1.msra.mxu0 0.0
      %509 = vmatprep.subr.mxu0 0.0
      %510 = vmatpush1.msra.mxu0 0.0
      %511 = vmatprep.subr.mxu0 0.0
      %512 = vmatpush1.msra.mxu0 0.0
      %513 = vmatprep.subr.mxu0 0.0
      %514 = vmatpush1.msra.mxu0 0.0
      %515 = vmatprep.subr.mxu0 0.0
      %516 = vmatpush1.msra.mxu0 0.0
      %517 = vmatprep.subr.mxu0 0.0
      %518 = vmatpush1.msra.mxu0 0.0
      %519 = vmatprep.subr.mxu0 0.0
      %520 = vmatpush1.msra.mxu0 0.0
      %521 = vmatprep.subr.mxu0 0.0
      %522 = vmatpush1.msra.mxu0 %v401
      %523 = vmatprep.subr.mxu0 0.0
      %524 = vmatpush1.msra.mxu0 %v400
      %525 = vmatprep.subr.mxu0 0.0
      %526 = vmatpush2.msra.mxu0 0.0
      %527 = vmatprep.subr.mxu0 0.0
      %528 = vmatpush2.msra.mxu0 0.0
      %529 = vmatprep.subr.mxu0 0.0
      %530 = vmatpush2.msra.mxu0 0.0
      %531 = vmatprep.subr.mxu0 0.0
      %532 = vmatpush2.msra.mxu0 0.0
      %533 = vmatprep.subr.mxu0 0.0
      %534 = vmatpush2.msra.mxu0 0.0
      %535 = vmatprep.subr.mxu0 0.0
      %536 = vmatpush2.msra.mxu0 0.0
      %537 = vmatprep.subr.mxu0 0.0
      %538 = vmatpush2.msra.mxu0 0.0
      %539 = vmatprep.subr.mxu0 0.0
      %540 = vmatpush2.msra.mxu0 0.0
      %541 = vmatprep.subr.mxu0 0.0
      %542 = vmatpush2.msra.mxu0 0.0
      %543 = vmatprep.subr.mxu0 0.0
      %544 = vmatpush2.msra.mxu0 0.0
      %545 = vmatprep.subr.mxu0 0.0
      %546 = vmatpush2.msra.mxu0 0.0
      %547 = vmatprep.subr.mxu0 0.0
      %548 = vmatpush2.msra.mxu0 0.0
      %549 = vmatprep.subr.mxu0 0.0
      %550 = vmatpush2.msra.mxu0 0.0
      %551 = vmatprep.subr.mxu0 0.0
      %552 = vmatpush2.msra.mxu0 0.0
      %553 = vmatprep.subr.mxu0 0.0
      %554 = vmatpush2.msra.mxu0 0.0
      %555 = vmatprep.subr.mxu0 0.0
      %556 = vmatpush2.msra.mxu0 0.0
      %557 = vmatprep.mubr.f32.mxu0 0.0
      %558 = vmatmul.mubr.f32.gmra.mxu0 %v488
      %v559 = vpop.f32.mrf.mxu0
      %v560 = vadd.f32 0.0, %v559
      %v561 = vpop.f32.mrf.mxu0
      %562 = vmatprep.mubr.f32.mxu0 0.0
      %563 = vmatmul.mubr.f32.gmra.mxu0 %v491
      %v564 = vpop.f32.mrf.mxu0
      %v565 = vadd.f32 0.0, %v564
      %v566 = vpop.f32.mrf.mxu0
      %567 = vdwg.mxu0
      %568 = vst.msk [vmem:[%s217] sm:$0xff] %vm316, %v560
      %569 = vst.msk [vmem:[%s217 + $0x8] sm:$0xff] %vm316, %v565
      %p570 = scmp.lt.s32.totalorder %s15, 1
      %s571 = scalar_select %p570, %s15, 1
      %s572 = smul.addr %s571, 2
      %s573 = smul.addr %s572, 8
      %s574 = scalar_lea.vmem %s4, %s573
      // Predicated region
      $region37: #{tpu_custom_call.1} parent=35 // pred_check
        %p575 = pneg %p127
      $region38: #{tpu_custom_call.1} parent=35 // pred_check_branch
        %577 = sbr.rel (%p575) target = $region40
      $region39: #{tpu_custom_call.1} parent=35 // pred_region
        _
      $region40: #{tpu_custom_call.1} parent=35 // pred_fallthru
        _
    $region36: #{tpu_custom_call.1} parent=5 // pred_fallthru
      _
    %p578 = scmp.le.s32.totalorder 2, %s10
    // Predicated region
    $region41: #{tpu_custom_call.1} parent=5 // pred_check
      %p579 = pneg %p578
    $region42: #{tpu_custom_call.1} parent=5 // pred_check_branch
      %581 = sbr.rel (%p579) target = $region44
    $region43: #{tpu_custom_call.1} parent=5 // pred_region
      %s582 = ssub.s32 %s10, 2
      // Predicated region
      $region45: #{tpu_custom_call.1} parent=43 // pred_check
        %p583 = pneg %p133
      $region46: #{tpu_custom_call.1} parent=43 // pred_check_branch
        %585 = sbr.rel (%p583) target = $region48
      $region47: #{tpu_custom_call.1} parent=43 // pred_region
        %p586 = scmp.lt.s32.totalorder %s16, 1
        %s587 = scalar_select %p586, %s16, 1
        %s588 = smul.addr %s587, 2
        %s589 = smul.addr %s588, 8
        %s590 = scalar_lea.vmem %s4, %s589
      $region48: #{tpu_custom_call.1} parent=43 // pred_fallthru
        _
    $region44: #{tpu_custom_call.1} parent=5 // pred_fallthru
      _
  $region6: #{tpu_custom_call.1} parent=0 // loop_footer
    %s14 = sadd.s32 1, %s10
  $region7: #{tpu_custom_call.1} parent=0 // loop_footer_branch
    %9 = sbr.rel target = $region3
  $region8: #{tpu_custom_call.1} parent=0 // loop_exit
    _

</llo_original>
